<compile_context>
chip_gen: v6e
topology: v6e:2x2x1
jax: 0.10.0
libtpu: 0.0.40
codegen_flags: <defaults>
</compile_context>

<pallas_src>
import jax
import jax.numpy as jnp
from jax.experimental import pallas as pl
from jax.experimental.pallas import tpu as pltpu

KH = KW = 3
PAD = 1


def _round_up(a, m):
    return ((a + m - 1) // m) * m


def _vmem_budget_bytes():
    """~75% of per-core VMEM (64 MiB on v7x, 128 MiB on v5e/v6e)."""
    cap = 64 * 1024 * 1024
    try:
        cap = int(getattr(pltpu.get_tpu_info(), "vmem_capacity_bytes", cap)) or cap
    except Exception:
        pass
    return max((cap // 4) * 3, 32 * 1024 * 1024)


def _choose_tile(hw, n_batch, ck, c_out, vmem_budget):
    """Spatial tile T (multiple of 128) and HW padded to a multiple of it.

    Per-step VMEM ~= double-buffered cols blocks (bf16, lane-padded)
    + double-buffered out blocks (f32) + resident weight/bias (conservatively
    counted double-buffered).  Prefer the largest tile that fits the budget,
    wastes <= ~12.5% on padding, and leaves >= 2 total grid steps so both v7x
    TensorCores get work.
    """
    ck_pad = _round_up(max(ck, 1), 128)
    co_pad = _round_up(max(c_out, 1), 8)
    best = 128
    for t in (256, 512, 1024, 2048, 4096):
        hw_pad = _round_up(hw, t)
        need = (2 * t * ck_pad * 2          # cols blocks (bf16)
                + 2 * co_pad * t * 4        # out blocks (f32)
                + 2 * co_pad * ck_pad * 2   # weight (bf16, counted x2)
                + 2 * co_pad * 128 * 4      # bias
                + (2 << 20))                # Mosaic scratch slack
        if (need <= vmem_budget
                and (hw_pad - hw) * 8 <= hw
                and n_batch * (hw_pad // t) >= 2):
            best = t
    return best, _round_up(hw, best)


def _deform_im2col_single(x, offsets, hw_pad, col_dtype):
    """x: (C_in, H, W), offsets: (2*9, H, W) -> cols (hw_pad, 9*C_in).

    cols[p, k*C_in + c] = bilinear sample of channel c at tap k of output
    pixel p (torchvision DeformConv2d semantics: offset channels are (dy, dx)
    pairs, corners outside the image contribute zero).  Rows >= H*W are zero.
    """
    C, H, W = x.shape
    HW = H * W
    K = KH * KW
    f32 = jnp.float32

    # Sampling coordinates / bilinear weights always in f32 (even for bf16 x).
    off = offsets.astype(f32).reshape(K, 2, H, W)
    dy = jnp.transpose(off[:, 0], (1, 2, 0))             # (H, W, K)
    dx = jnp.transpose(off[:, 1], (1, 2, 0))
    gy = jax.lax.broadcasted_iota(f32, (H, W, K), 0)
    gx = jax.lax.broadcasted_iota(f32, (H, W, K), 1)
    k = jnp.arange(K)
    ky = (k // KW - PAD).astype(f32)
    kx = (k % KW - PAD).astype(f32)
    py = gy + ky + dy
    px = gx + kx + dx

    y0 = jnp.floor(py)
    x0 = jnp.floor(px)
    y1 = y0 + 1.0
    x1 = x0 + 1.0
    wy1 = py - y0
    wy0 = 1.0 - wy1
    wx1 = px - x0
    wx0 = 1.0 - wx1

    ys = jnp.stack([y0, y0, y1, y1], axis=-1)             # (H, W, K, 4)
    xs = jnp.stack([x0, x1, x0, x1], axis=-1)
    ws = jnp.stack([wy0 * wx0, wy0 * wx1, wy1 * wx0, wy1 * wx1], axis=-1)
    valid = (ys >= 0) & (ys <= H - 1) & (xs >= 0) & (xs <= W - 1)
    ws = ws * valid.astype(f32)
    idx = (jnp.clip(ys, 0, H - 1).astype(jnp.int32) * W
           + jnp.clip(xs, 0, W - 1).astype(jnp.int32))    # (H, W, K, 4)

    idx = idx.reshape(HW, K, 4)
    ws = ws.reshape(HW, K, 4)
    if hw_pad > HW:                                        # zero-weight pad rows
        pad = ((0, hw_pad - HW), (0, 0), (0, 0))
        idx = jnp.pad(idx, pad)
        ws = jnp.pad(ws, pad)

    # ONE gather for all 4 corners x 9 taps, along the major axis of (HW, C).
    x_hwc = jnp.transpose(x, (1, 2, 0)).reshape(HW, C)
    vals = jnp.take(x_hwc, idx.reshape(-1), axis=0, mode="clip")
    vals = vals.reshape(hw_pad, K, 4, C).astype(f32)
    cols = jnp.sum(vals * ws[..., None], axis=2)           # (hw_pad, K, C)
    return cols.reshape(hw_pad, K * C).astype(col_dtype)   # bf16 at source


def _deform_matmul_relu_kernel(cols_ref, w_ref, b_ref, o_ref):
    # cols_ref: (T, CK) | w_ref: (C_out, CK) | b_ref: (C_out, 1) f32
    # o_ref: (C_out, T) -> lane-dense output tile.
    acc = jax.lax.dot_general(
        w_ref[...], cols_ref[...],
        dimension_numbers=(((1,), (1,)), ((), ())),   # contract CK of both
        preferred_element_type=jnp.float32)
    acc = acc + b_ref[...]
    o_ref[...] = jnp.maximum(acc, 0.0).astype(o_ref.dtype)


def deform_conv_block(x, offsets, weight, bias,
                      *, gemm_dtype=jnp.bfloat16, out_dtype=None):
    """DeformConv2d(kernel=3, stride=1, padding=1) + ReLU.

    x: (N, C_in, H, W), offsets: (N, 18, H, W), weight: (C_out, C_in, 3, 3),
    bias: (C_out,)  ->  (N, C_out, H, W).

    gemm_dtype=bf16 (default) trades ~1e-2 relative error for half the cols
    HBM traffic and bf16 MXU peak; pass jnp.float32 for reference-exact math.
    out_dtype defaults to x.dtype (pass jnp.bfloat16 to halve the store
    stream if the consumer tolerates it).
    """
    N, C_in, H, W = x.shape
    C_out = weight.shape[0]
    HW = H * W
    CK = C_in * KH * KW
    out_dtype = x.dtype if out_dtype is None else out_dtype

    vmem_budget = _vmem_budget_bytes()
    T, HW_pad = _choose_tile(HW, N, CK, C_out, vmem_budget)

    # Deformable im2col: single major-axis gather, bf16 at source, already
    # padded to HW_pad and laid out (HW_pad, CK) -> no post-hoc relayout.
    cols = jax.vmap(
        lambda xb, ob: _deform_im2col_single(xb, ob, HW_pad, gemm_dtype)
    )(x, offsets)                                            # (N, HW_pad, CK)

    # Weight reordered so its contraction dim matches cols' (kh, kw, c_in).
    w2d = jnp.transpose(weight, (0, 2, 3, 1)).reshape(C_out, CK).astype(gemm_dtype)
    b2d = bias.reshape(C_out, 1).astype(jnp.float32)

    grid = (N, HW_pad // T)
    out = pl.pallas_call(
        _deform_matmul_relu_kernel,
        out_shape=jax.ShapeDtypeStruct((N, C_out, HW_pad), out_dtype),
        grid_spec=pltpu.PrefetchScalarGridSpec(
            num_scalar_prefetch=0,
            grid=grid,
            in_specs=[
                # full-CK minor dim => each cols tile is one contiguous HBM read
                pl.BlockSpec((None, T, CK), lambda n, t: (n, t, 0)),
                pl.BlockSpec((C_out, CK), lambda n, t: (0, 0)),   # resident
                pl.BlockSpec((C_out, 1), lambda n, t: (0, 0)),    # resident
            ],
            out_specs=pl.BlockSpec((None, C_out, T), lambda n, t: (n, 0, t)),
        ),
        compiler_params=pltpu.CompilerParams(
            dimension_semantics=("parallel", "parallel"),
            vmem_limit_bytes=vmem_budget,
        ),
    )(cols, w2d, b2d)

    # (N, C_out, HW_pad) is channel-major: drop the pad, free reshape to NCHW.
    return out[:, :, :HW].reshape(N, C_out, H, W)


if __name__ == "__main__":
    key = jax.random.PRNGKey(0)
    N, C_in, C_out, H, W = 2, 4, 8, 16, 16
    k1, k2, k3, k4 = jax.random.split(key, 4)

    x = jax.random.normal(k1, (N, C_in, H, W), dtype=jnp.float32)
    offsets = 0.5 * jax.random.normal(k2, (N, 2 * KH * KW, H, W),
                                      dtype=jnp.float32)

    fan_in = C_in * KH * KW
    weight = jax.random.normal(k3, (C_out, C_in, KH, KW),
                               dtype=jnp.float32) / jnp.sqrt(float(fan_in))
    bias = 0.01 * jax.random.normal(k4, (C_out,), dtype=jnp.float32)

    fwd = jax.jit(deform_conv_block)
    out = fwd(x, offsets, weight, bias)
    jax.block_until_ready(out)
    assert out.shape == (N, C_out, H, W)

    # Sanity check of the Pallas GEMM+bias+ReLU against an f32 einsum over the
    # same deformable-im2col (bf16 GEMM => generous tolerance).
    cols_ref = jax.vmap(
        lambda xb, ob: _deform_im2col_single(xb, ob, H * W, jnp.float32)
    )(x, offsets)
    w2d_ref = jnp.transpose(weight, (0, 2, 3, 1)).reshape(C_out, -1)
    ref = jnp.einsum("npk,ok->nop", cols_ref, w2d_ref) + bias[None, :, None]
    ref = jnp.maximum(ref, 0.0).reshape(N, C_out, H, W)
    err = float(jnp.max(jnp.abs(out.astype(jnp.float32) - ref)))
    assert err < 5e-2, f"max abs error {err}"

    print("KERNEL_OK")
</pallas_src>

<mosaic_0001>
module attributes {stable_mosaic.version = 11 : i64} {
  func.func @_deform_matmul_relu_kernel(%arg0: i32, %arg1: i32, %arg2: memref<1x256x36xbf16, #tpu.memory_space<vmem>>, %arg3: memref<8x36xbf16, #tpu.memory_space<vmem>>, %arg4: memref<8x1xf32, #tpu.memory_space<vmem>>, %arg5: memref<1x8x256xf32, #tpu.memory_space<vmem>>) attributes {dimension_semantics = [#tpu.dimension_semantics<parallel>, #tpu.dimension_semantics<parallel>], iteration_bounds = array<i64: 2, 1>, scalar_prefetch = 0 : i64, scratch_operands = 0 : i64, tpu.core_type = #tpu.core_type<tc>, window_params = [{transform_indices = @transform_0, window_bounds = array<i64: 1, 256, 36>}, {pipeline_mode = #tpu.pipeline_mode<synchronous>, transform_indices = @transform_1, window_bounds = array<i64: 8, 36>}, {pipeline_mode = #tpu.pipeline_mode<synchronous>, transform_indices = @transform_2, window_bounds = array<i64: 8, 1>}, {transform_indices = @transform_3, window_bounds = array<i64: 1, 8, 256>}]} {
    %c0 = arith.constant 0 : index
    %c0_0 = arith.constant 0 : index
    %0 = vector.load %arg3[%c0, %c0_0] : memref<8x36xbf16, #tpu.memory_space<vmem>>, vector<8x36xbf16>
    %c0_1 = arith.constant 0 : index
    %c0_2 = arith.constant 0 : index
    %c0_3 = arith.constant 0 : index
    %1 = vector.load %arg2[%c0_1, %c0_2, %c0_3] : memref<1x256x36xbf16, #tpu.memory_space<vmem>>, vector<1x256x36xbf16>
    %2 = vector.shape_cast %1 : vector<1x256x36xbf16> to vector<256x36xbf16>
    %cst = arith.constant dense<0.000000e+00> : vector<8x256xf32>
    %3 = tpu.matmul %0, %2, %cst {dimension_numbers = #tpu.dot_dimension_numbers<[1], [1], [0], [0], [0, 0, 1, 0], [], []>} : vector<8x36xbf16>, vector<256x36xbf16>, vector<8x256xf32> -> vector<8x256xf32>
    %c0_4 = arith.constant 0 : index
    %c0_5 = arith.constant 0 : index
    %4 = vector.load %arg4[%c0_4, %c0_5] : memref<8x1xf32, #tpu.memory_space<vmem>>, vector<8x1xf32>
    %5 = vector.broadcast %4 : vector<8x1xf32> to vector<8x256xf32>
    %6 = arith.addf %3, %5 : vector<8x256xf32>
    %cst_6 = arith.constant 0.000000e+00 : f32
    %7 = vector.broadcast %cst_6 : f32 to vector<8x256xf32>
    %8 = arith.maximumf %6, %7 : vector<8x256xf32>
    %c0_7 = arith.constant 0 : index
    %c0_8 = arith.constant 0 : index
    %c0_9 = arith.constant 0 : index
    %9 = vector.load %arg5[%c0_7, %c0_8, %c0_9] : memref<1x8x256xf32, #tpu.memory_space<vmem>>, vector<1x8x256xf32>
    %10 = vector.shape_cast %9 : vector<1x8x256xf32> to vector<8x256xf32>
    %11 = vector.shape_cast %8 : vector<8x256xf32> to vector<1x8x256xf32>
    tpu.vector_store %arg5[%c0_7, %c0_8, %c0_9], %11 {strides = array<i32>} : memref<1x8x256xf32, #tpu.memory_space<vmem>>, vector<1x8x256xf32>,
    return
  }
  func.func @transform_0(%arg0: i32, %arg1: i32) -> (i32, i32, i32) {
    %c0_i32 = arith.constant 0 : i32
    %c0_i32_0 = arith.constant 0 : i32
    return %arg0, %arg1, %c0_i32 : i32, i32, i32
  }
  func.func @transform_1(%arg0: i32, %arg1: i32) -> (i32, i32) {
    %c0_i32 = arith.constant 0 : i32
    %c0_i32_0 = arith.constant 0 : i32
    %c0_i32_1 = arith.constant 0 : i32
    return %c0_i32, %c0_i32_0 : i32, i32
  }
  func.func @transform_2(%arg0: i32, %arg1: i32) -> (i32, i32) {
    %c0_i32 = arith.constant 0 : i32
    %c0_i32_0 = arith.constant 0 : i32
    %c0_i32_1 = arith.constant 0 : i32
    return %c0_i32, %c0_i32_0 : i32, i32
  }
  func.func @transform_3(%arg0: i32, %arg1: i32) -> (i32, i32, i32) {
    %c0_i32 = arith.constant 0 : i32
    %c0_i32_0 = arith.constant 0 : i32
    return %arg0, %c0_i32, %arg1 : i32, i32, i32
  }
}

</mosaic_0001>

<llo_original>
// kernel: deform_conv_block.1
$region0: #{deform_conv_block.1}
  #allocation0 [shape = 'u32[]', space=smem, size = 0x4, offset = 0x4, fixed_abs, tag = 'smem constant byte address 0x4 - core index']
  #allocation1 [shape = 'u32[144,128]{1,0:T(1,128)}', space=vmem, size = 0x12000, scoped, tag = 'internal scratch']
  %s0 = inlined_call_operand.vmem [shape: bf16[2,256,36], index: 0, kind: input, shape index: {}]
  %s1 = inlined_call_operand.vmem [shape: bf16[8,36], index: 1, kind: input, shape index: {}]
  %s2 = inlined_call_operand.vmem [shape: f32[8,1], index: 2, kind: input, shape index: {}]
  %s3 = inlined_call_operand.vmem [shape: f32[2,8,256], index: 3, kind: output, shape index: {}]
  %s4 = sld [smem:[#allocation0]]
  $region45: #{deform_conv_block.1} parent=0
    _
  %s6 = ssub.s32 1, %s4
  %s7 = scalar_select 0, %s6, %s4
  loop: start=0, step=1, limit=4
  $region2: #{deform_conv_block.1} parent=0 // loop_pre_header
    _
  $region3: #{deform_conv_block.1} parent=0 // loop_header
    %s9 = sphi 0, %s13
    %p10 = scmp.ge.s32.totalorder %s9, 4
    %s16 = sphi 0, %s28
    %s17 = sphi 0, %s24
    %s18 = sphi 0, %s16
    %s19 = sphi 0, %s17
    %s20 = sphi 0, %s18
    %s21 = sphi 0, %s19
    %s33 = sphi 0, %s35
    %s36 = sphi 0, %s33
    %s37 = sphi 0, %s36
    %s53 = sphi 0, %s37
    %s57 = sphi 0, %s57
    %s59 = sphi 0, %s57
    %s60 = sphi 0, %s59
    %s74 = sphi 0, %s60
    %s78 = sphi 0, %s78
    %s80 = sphi 0, %s78
    %s81 = sphi 0, %s80
    %s95 = sphi 0, %s81
    %s103 = sphi 0, %s105
    %s106 = sphi 0, %s103
    %s107 = sphi 0, %s106
    %s123 = sphi 0, %s107
  $region4: #{deform_conv_block.1} parent=0 // loop_header_branch
    %12 = sbr.rel (%p10) target = $region8
  $region5: #{deform_conv_block.1} parent=0 // loop_body
    %s14 = ssub.s32 %s9, 1
    %s15 = ssub.s32 %s9, 2
    %s22 = sadd.s32 1, %s17
    %p23 = scmp.ge.s32.totalorder %s22, 1
    %s24 = scalar_select %p23, 0, %s22
    %s25 = sadd.s32 1, %s16
    %s26 = scalar_select %p23, %s25, %s16
    %p27 = scmp.ge.s32.totalorder %s26, 2
    %s28 = scalar_select %p27, 0, %s26
    %s29 = ssub.s32 %s16, %s28
    %s30 = ssub.s32 %s17, %s24
    %s31 = sor.u32 %s29, %s30
    %p32 = scmp.eq.s32.totalorder %s31, 0
    %s34 = sadd.s32 %s33, 1
    %s35 = scalar_select %p32, %s33, %s34
    %p38 = pneg %p32
    %p39 = scmp.eq.s32.totalorder %s9, 1
    %p40 = por %p38, %p39
    %p41 = scmp.ne.s32.totalorder %s33, %s36
    %p42 = scmp.eq.s32.totalorder %s9, 0
    %p43 = por %p41, %p42
    %p44 = scmp.ne.s32.totalorder %s33, %s36
    %p45 = scmp.eq.s32.totalorder %s14, 1
    %p46 = por %p44, %p45
    %p47 = scmp.ne.s32.totalorder %s36, %s37
    %p48 = scmp.eq.s32.totalorder %s14, 0
    %p49 = por %p47, %p48
    %p50 = scmp.ne.s32.totalorder %s36, %s37
    %p51 = scmp.eq.s32.totalorder %s15, 1
    %p52 = por %p50, %p51
    %p54 = scmp.ne.s32.totalorder %s37, %s53
    %p55 = scmp.eq.s32.totalorder %s15, 0
    %p56 = por %p54, %p55
    %s58 = sadd.s32 %s57, 1
    %p61 = scmp.eq.s32.totalorder %s9, 1
    %p62 = scmp.ne.s32.totalorder %s57, %s59
    %p63 = scmp.eq.s32.totalorder %s9, 0
    %p64 = por %p62, %p63
    %p65 = scmp.ne.s32.totalorder %s57, %s59
    %p66 = scmp.eq.s32.totalorder %s14, 1
    %p67 = por %p65, %p66
    %p68 = scmp.ne.s32.totalorder %s59, %s60
    %p69 = scmp.eq.s32.totalorder %s14, 0
    %p70 = por %p68, %p69
    %p71 = scmp.ne.s32.totalorder %s59, %s60
    %p72 = scmp.eq.s32.totalorder %s15, 1
    %p73 = por %p71, %p72
    %p75 = scmp.ne.s32.totalorder %s60, %s74
    %p76 = scmp.eq.s32.totalorder %s15, 0
    %p77 = por %p75, %p76
    %s79 = sadd.s32 %s78, 1
    %p82 = scmp.eq.s32.totalorder %s9, 1
    %p83 = scmp.ne.s32.totalorder %s78, %s80
    %p84 = scmp.eq.s32.totalorder %s9, 0
    %p85 = por %p83, %p84
    %p86 = scmp.ne.s32.totalorder %s78, %s80
    %p87 = scmp.eq.s32.totalorder %s14, 1
    %p88 = por %p86, %p87
    %p89 = scmp.ne.s32.totalorder %s80, %s81
    %p90 = scmp.eq.s32.totalorder %s14, 0
    %p91 = por %p89, %p90
    %p92 = scmp.ne.s32.totalorder %s80, %s81
    %p93 = scmp.eq.s32.totalorder %s15, 1
    %p94 = por %p92, %p93
    %p96 = scmp.ne.s32.totalorder %s81, %s95
    %p97 = scmp.eq.s32.totalorder %s15, 0
    %p98 = por %p96, %p97
    %s99 = ssub.s32 %s16, %s28
    %s100 = ssub.s32 %s17, %s24
    %s101 = sor.u32 %s99, %s100
    %p102 = scmp.eq.s32.totalorder %s101, 0
    %s104 = sadd.s32 %s103, 1
    %s105 = scalar_select %p102, %s103, %s104
    %p108 = pneg %p102
    %p109 = scmp.eq.s32.totalorder %s9, 1
    %p110 = por %p108, %p109
    %p111 = scmp.ne.s32.totalorder %s103, %s106
    %p112 = scmp.eq.s32.totalorder %s9, 0
    %p113 = por %p111, %p112
    %p114 = scmp.ne.s32.totalorder %s103, %s106
    %p115 = scmp.eq.s32.totalorder %s14, 1
    %p116 = por %p114, %p115
    %p117 = scmp.ne.s32.totalorder %s106, %s107
    %p118 = scmp.eq.s32.totalorder %s14, 0
    %p119 = por %p117, %p118
    %p120 = scmp.ne.s32.totalorder %s106, %s107
    %p121 = scmp.eq.s32.totalorder %s15, 1
    %p122 = por %p120, %p121
    %p124 = scmp.ne.s32.totalorder %s107, %s123
    %p125 = scmp.eq.s32.totalorder %s15, 0
    %p126 = por %p124, %p125
    %p127 = scmp.le.s32.totalorder 1, %s9
    %p128 = scmp.lt.s32.totalorder %s9, 3
    %p129 = pnand %p127, %p128
    %p130 = pneg %p129
    // Predicated region
    $region9: #{deform_conv_block.1} parent=5 // pred_check
      _
    $region10: #{deform_conv_block.1} parent=5 // pred_check_branch
      %132 = sbr.rel (%p129) target = $region12
    $region11: #{deform_conv_block.1} parent=5 // pred_region
      %s133 = ssub.s32 %s9, 1
      // Predicated region
      $region13: #{deform_conv_block.1} parent=11 // pred_check
        %p134 = pneg %p70
      $region14: #{deform_conv_block.1} parent=11 // pred_check_branch
        %136 = sbr.rel (%p134) target = $region16
      $region15: #{deform_conv_block.1} parent=11 // pred_region
        _
      $region16: #{deform_conv_block.1} parent=11 // pred_fallthru
        _
      // Predicated region
      $region17: #{deform_conv_block.1} parent=11 // pred_check
        %p137 = pneg %p91
      $region18: #{deform_conv_block.1} parent=11 // pred_check_branch
        %139 = sbr.rel (%p137) target = $region20
      $region19: #{deform_conv_block.1} parent=11 // pred_region
        _
      $region20: #{deform_conv_block.1} parent=11 // pred_fallthru
        _
    $region12: #{deform_conv_block.1} parent=5 // pred_fallthru
      _
    %p140 = scmp.lt.s32.totalorder %s9, 2
    // Predicated region
    $region21: #{deform_conv_block.1} parent=5 // pred_check
      %p141 = pneg %p140
    $region22: #{deform_conv_block.1} parent=5 // pred_check_branch
      %143 = sbr.rel (%p141) target = $region24
    $region23: #{deform_conv_block.1} parent=5 // pred_region
      // Predicated region
      $region25: #{deform_conv_block.1} parent=23 // pred_check
        %p144 = pneg %p43
      $region26: #{deform_conv_block.1} parent=23 // pred_check_branch
        %146 = sbr.rel (%p144) target = $region28
      $region27: #{deform_conv_block.1} parent=23 // pred_region
        %s147 = smul.u32 32, %s17
        %p148 = scmp.lt.s32.totalorder %s16, 1
        %s149 = scalar_select %p148, %s16, 1
        %p150 = scmp.lt.s32.totalorder %s147, 31
        %s151 = scalar_select %p150, %s147, 31
        %s152 = smul.addr %s149, 32
        %s153 = sadd.s32 %s151, %s152
        %s154 = smul.addr %s153, 4
        %s155 = scalar_lea.vmem %s0, %s154
        %s156 = smul.u32 32, %s17
      $region28: #{deform_conv_block.1} parent=23 // pred_fallthru
        _
    $region24: #{deform_conv_block.1} parent=5 // pred_fallthru
      _
    %p157 = scmp.le.s32.totalorder 1, %s9
    %p158 = scmp.lt.s32.totalorder %s9, 3
    %p159 = pnand %p157, %p158
    %p160 = pneg %p159
    // Predicated region
    $region29: #{deform_conv_block.1} parent=5 // pred_check
      _
    $region30: #{deform_conv_block.1} parent=5 // pred_check_branch
      %162 = sbr.rel (%p159) target = $region32
    $region31: #{deform_conv_block.1} parent=5 // pred_region
      %s163 = ssub.s32 %s9, 1
      %s164 = smul.u32 32, %s19
      %p165 = scmp.lt.s32.totalorder %s18, 1
      %s166 = scalar_select %p165, %s18, 1
      %p167 = scmp.lt.s32.totalorder %s164, 31
      %s168 = scalar_select %p167, %s164, 31
      %s169 = smul.addr %s166, 32
      %s170 = sadd.s32 %s168, %s169
      %s171 = smul.addr %s170, 4
      %s172 = scalar_lea.vmem %s0, %s171
      %p173 = pneg %p49
      %p174 = pneg %p46
      %p175 = pneg %p70
      %p176 = pneg %p67
      %p177 = pneg %p91
      %p178 = pneg %p88
      %p179 = pneg %p119
      %p180 = pneg %p116
      %s181 = smul.u32 2, %s19
      %p182 = scmp.lt.s32.totalorder %s18, 1
      %s183 = scalar_select %p182, %s18, 1
      %p184 = scmp.lt.s32.totalorder %s181, 1
      %s185 = scalar_select %p184, %s181, 1
      %s186 = smul.addr %s183, 2
      %s187 = sadd.s32 %s185, %s186
      %s188 = smul.addr %s187, 8
      %s189 = scalar_lea.vmem %s3, %s188
      %s190 = smul.u32 32, %s19
      %p191 = scmp.lt.s32.totalorder %s18, 1
      %s192 = scalar_select %p191, %s18, 1
      %p193 = scmp.lt.s32.totalorder %s190, 31
      %s194 = scalar_select %p193, %s190, 31
      %s195 = smul.addr %s192, 32
      %s196 = sadd.s32 %s194, %s195
      %s197 = smul.addr %s196, 4
      %s198 = scalar_lea.vmem %s0, %s197
      %s199 = smul.u32 32, %s19
      %s200 = smul.u32 2, %s19
      %p201 = scmp.lt.s32.totalorder %s18, 1
      %s202 = scalar_select %p201, %s18, 1
      %p203 = scmp.lt.s32.totalorder %s200, 1
      %s204 = scalar_select %p203, %s200, 1
      %s205 = smul.addr %s202, 2
      %s206 = sadd.s32 %s204, %s205
      %s207 = smul.addr %s206, 8
      %s208 = scalar_lea.vmem %s3, %s207
      %s209 = smul.u32 2, %s19
      %v211 = vld [vmem:[%s1] sm:$0xf]
      %v212 = vld [vmem:[%s198] sm:$0xf]
      %v213 = vld [vmem:[%s198 + $0x4] sm:$0xf]
      %v214 = vld [vmem:[%s198 + $0x8] sm:$0xf]
      %v215 = vld [vmem:[%s198 + $0xc] sm:$0xf]
      %v216 = vld [vmem:[%s198 + $0x10] sm:$0xf]
      %v217 = vld [vmem:[%s198 + $0x14] sm:$0xf]
      %v218 = vld [vmem:[%s198 + $0x18] sm:$0xf]
      %v219 = vld [vmem:[%s198 + $0x1c] sm:$0xf]
      %v220 = vld [vmem:[%s198 + $0x20] sm:$0xf]
      %v221 = vld [vmem:[%s198 + $0x24] sm:$0xf]
      %v222 = vld [vmem:[%s198 + $0x28] sm:$0xf]
      %v223 = vld [vmem:[%s198 + $0x2c] sm:$0xf]
      %v224 = vld [vmem:[%s198 + $0x30] sm:$0xf]
      %v225 = vld [vmem:[%s198 + $0x34] sm:$0xf]
      %v226 = vld [vmem:[%s198 + $0x38] sm:$0xf]
      %v227 = vld [vmem:[%s198 + $0x3c] sm:$0xf]
      %v228 = vld [vmem:[%s198 + $0x40] sm:$0xf]
      %v229 = vld [vmem:[%s198 + $0x44] sm:$0xf]
      %v230 = vld [vmem:[%s198 + $0x48] sm:$0xf]
      %v231 = vld [vmem:[%s198 + $0x4c] sm:$0xf]
      %v232 = vld [vmem:[%s198 + $0x50] sm:$0xf]
      %v233 = vld [vmem:[%s198 + $0x54] sm:$0xf]
      %v234 = vld [vmem:[%s198 + $0x58] sm:$0xf]
      %v235 = vld [vmem:[%s198 + $0x5c] sm:$0xf]
      %v236 = vld [vmem:[%s198 + $0x60] sm:$0xf]
      %v237 = vld [vmem:[%s198 + $0x64] sm:$0xf]
      %v238 = vld [vmem:[%s198 + $0x68] sm:$0xf]
      %v239 = vld [vmem:[%s198 + $0x6c] sm:$0xf]
      %v240 = vld [vmem:[%s198 + $0x70] sm:$0xf]
      %v241 = vld [vmem:[%s198 + $0x74] sm:$0xf]
      %v242 = vld [vmem:[%s198 + $0x78] sm:$0xf]
      %v243 = vld [vmem:[%s198 + $0x7c] sm:$0xf]
      %v244 = vld [vmem:[%s2] sm:$0xff]
      %246 = vset.pattern.permute.xlu0 0
      %247 = vperm.xlu0 %246, %v244
      %v248 = vpop.permute.xlu0 %247
      %v282 = vunpack.c.l.b16 %v212
      %v283 = vunpack.c.l.b16 %v213
      %v284 = vunpack.c.l.b16 %v214
      %v285 = vunpack.c.l.b16 %v215
      %v286 = vunpack.c.l.b16 %v216
      %v287 = vunpack.c.l.b16 %v217
      %v288 = vunpack.c.l.b16 %v218
      %v289 = vunpack.c.l.b16 %v219
      %v290 = vunpack.c.l.b16 %v220
      %v291 = vunpack.c.l.b16 %v221
      %v292 = vunpack.c.l.b16 %v222
      %v293 = vunpack.c.l.b16 %v223
      %v294 = vunpack.c.l.b16 %v224
      %v295 = vunpack.c.l.b16 %v225
      %v296 = vunpack.c.l.b16 %v226
      %v297 = vunpack.c.l.b16 %v227
      %v298 = vunpack.c.l.b16 %v228
      %v299 = vunpack.c.l.b16 %v229
      %v300 = vunpack.c.l.b16 %v230
      %v301 = vunpack.c.l.b16 %v231
      %v302 = vunpack.c.l.b16 %v232
      %v303 = vunpack.c.l.b16 %v233
      %v304 = vunpack.c.l.b16 %v234
      %v305 = vunpack.c.l.b16 %v235
      %v306 = vunpack.c.l.b16 %v236
      %v307 = vunpack.c.l.b16 %v237
      %v308 = vunpack.c.l.b16 %v238
      %v309 = vunpack.c.l.b16 %v239
      %v310 = vunpack.c.l.b16 %v240
      %v311 = vunpack.c.l.b16 %v241
      %v312 = vunpack.c.l.b16 %v242
      %v313 = vunpack.c.l.b16 %v243
      %v314 = vpack.c.b16 %v283, %v282
      %v315 = vpack.c.b16 %v285, %v284
      %v316 = vpack.c.b16 %v287, %v286
      %v317 = vpack.c.b16 %v289, %v288
      %v318 = vpack.c.b16 %v291, %v290
      %v319 = vpack.c.b16 %v293, %v292
      %v320 = vpack.c.b16 %v295, %v294
      %v321 = vpack.c.b16 %v297, %v296
      %v322 = vpack.c.b16 %v299, %v298
      %v323 = vpack.c.b16 %v301, %v300
      %v324 = vpack.c.b16 %v303, %v302
      %v325 = vpack.c.b16 %v305, %v304
      %v326 = vpack.c.b16 %v307, %v306
      %v327 = vpack.c.b16 %v309, %v308
      %v328 = vpack.c.b16 %v311, %v310
      %v329 = vpack.c.b16 %v313, %v312
      %vm330 = vcmask 293888
      %v332 = vsel %vm330, %v211, 0
      %v335 = vsel %vm330, %v314, 0
      %v338 = vsel %vm330, %v315, 0
      %v341 = vsel %vm330, %v316, 0
      %v344 = vsel %vm330, %v317, 0
      %v347 = vsel %vm330, %v318, 0
      %v350 = vsel %vm330, %v319, 0
      %v353 = vsel %vm330, %v320, 0
      %v356 = vsel %vm330, %v321, 0
      %v359 = vsel %vm330, %v322, 0
      %v362 = vsel %vm330, %v323, 0
      %v365 = vsel %vm330, %v324, 0
      %v368 = vsel %vm330, %v325, 0
      %v371 = vsel %vm330, %v326, 0
      %v374 = vsel %vm330, %v327, 0
      %v377 = vsel %vm330, %v328, 0
      %v380 = vsel %vm330, %v329, 0
      %382 = vmatprep.subr.bf16.mxu0 0
      %383 = vmatpush1.bf16.xpose.msra.mxu0 %v356
      %384 = vmatprep.subr.bf16.mxu0 0
      %385 = vmatpush1.bf16.xpose.msra.mxu0 %v353
      %386 = vmatprep.subr.bf16.mxu0 0
      %387 = vmatpush1.bf16.xpose.msra.mxu0 %v350
      %388 = vmatprep.subr.bf16.mxu0 0
      %389 = vmatpush1.bf16.xpose.msra.mxu0 %v347
      %390 = vmatprep.subr.bf16.mxu0 0
      %391 = vmatpush1.bf16.xpose.msra.mxu0 %v344
      %392 = vmatprep.subr.bf16.mxu0 0
      %393 = vmatpush1.bf16.xpose.msra.mxu0 %v341
      %394 = vmatprep.subr.bf16.mxu0 0
      %395 = vmatpush1.bf16.xpose.msra.mxu0 %v338
      %396 = vmatprep.subr.bf16.mxu0 0
      %397 = vmatpush1.bf16.xpose.msra.mxu0 %v335
      %398 = vmatprep.subr.bf16.mxu0 0
      %399 = vmatpush2.bf16.xpose.msra.mxu0 %v380
      %400 = vmatprep.subr.bf16.mxu0 0
      %401 = vmatpush2.bf16.xpose.msra.mxu0 %v377
      %402 = vmatprep.subr.bf16.mxu0 0
      %403 = vmatpush2.bf16.xpose.msra.mxu0 %v374
      %404 = vmatprep.subr.bf16.mxu0 0
      %405 = vmatpush2.bf16.xpose.msra.mxu0 %v371
      %406 = vmatprep.subr.bf16.mxu0 0
      %407 = vmatpush2.bf16.xpose.msra.mxu0 %v368
      %408 = vmatprep.subr.bf16.mxu0 0
      %409 = vmatpush2.bf16.xpose.msra.mxu0 %v365
      %410 = vmatprep.subr.bf16.mxu0 0
      %411 = vmatpush2.bf16.xpose.msra.mxu0 %v362
      %412 = vmatprep.subr.bf16.mxu0 0
      %413 = vmatpush2.bf16.xpose.msra.mxu0 %v359
      %414 = vmatprep.mubr.bf16.mxu0 0
      %415 = vmatmul.mubr.bf16.gmra.mxu0 %v332
      %v416 = vpop.f32.mrf.mxu0
      %v417 = vadd.f32 %v248, %v416
      %v418 = vpop.f32.mrf.mxu0
      %v419 = vadd.f32 %v248, %v418
      %v420 = vpop.f32.mrf.mxu0
      %v421 = vpop.f32.mrf.mxu0
      %422 = vdwg.mxu0
      %v423 = vmax.f32 %v417, 0.0
      %v424 = vmax.f32 %v419, 0.0
      %425 = vst [vmem:[%s208] sm:$0xff] %v423
      %426 = vst [vmem:[%s208 + $0x8] sm:$0xff] %v424
      %s427 = smul.u32 2, %s19
      %p428 = scmp.lt.s32.totalorder %s18, 1
      %s429 = scalar_select %p428, %s18, 1
      %p430 = scmp.lt.s32.totalorder %s427, 1
      %s431 = scalar_select %p430, %s427, 1
      %s432 = smul.addr %s429, 2
      %s433 = sadd.s32 %s431, %s432
      %s434 = smul.addr %s433, 8
      %s435 = scalar_lea.vmem %s3, %s434
      // Predicated region
      $region33: #{deform_conv_block.1} parent=31 // pred_check
        %p436 = pneg %p116
      $region34: #{deform_conv_block.1} parent=31 // pred_check_branch
        %438 = sbr.rel (%p436) target = $region36
      $region35: #{deform_conv_block.1} parent=31 // pred_region
        %s439 = smul.u32 2, %s19
      $region36: #{deform_conv_block.1} parent=31 // pred_fallthru
        _
    $region32: #{deform_conv_block.1} parent=5 // pred_fallthru
      _
    %p440 = scmp.le.s32.totalorder 2, %s9
    // Predicated region
    $region37: #{deform_conv_block.1} parent=5 // pred_check
      %p441 = pneg %p440
    $region38: #{deform_conv_block.1} parent=5 // pred_check_branch
      %443 = sbr.rel (%p441) target = $region40
    $region39: #{deform_conv_block.1} parent=5 // pred_region
      %s444 = ssub.s32 %s9, 2
      // Predicated region
      $region41: #{deform_conv_block.1} parent=39 // pred_check
        %p445 = pneg %p122
      $region42: #{deform_conv_block.1} parent=39 // pred_check_branch
        %447 = sbr.rel (%p445) target = $region44
      $region43: #{deform_conv_block.1} parent=39 // pred_region
        %s448 = smul.u32 2, %s21
        %p449 = scmp.lt.s32.totalorder %s20, 1
        %s450 = scalar_select %p449, %s20, 1
        %p451 = scmp.lt.s32.totalorder %s448, 1
        %s452 = scalar_select %p451, %s448, 1
        %s453 = smul.addr %s450, 2
        %s454 = sadd.s32 %s452, %s453
        %s455 = smul.addr %s454, 8
        %s456 = scalar_lea.vmem %s3, %s455
      $region44: #{deform_conv_block.1} parent=39 // pred_fallthru
        _
    $region40: #{deform_conv_block.1} parent=5 // pred_fallthru
      _
  $region6: #{deform_conv_block.1} parent=0 // loop_footer
    %s13 = sadd.s32 1, %s9
  $region7: #{deform_conv_block.1} parent=0 // loop_footer_branch
    %8 = sbr.rel target = $region3
  $region8: #{deform_conv_block.1} parent=0 // loop_exit
    _

</llo_original>
